<compile_context>
chip_gen: v6e
topology: v6e:2x2x1
jax: 0.10.0
libtpu: 0.0.40
codegen_flags: <defaults>
</compile_context>

<pallas_src>
import jax
import jax.numpy as jnp
from jax.experimental import pallas as pl
from jax.experimental.pallas import tpu as pltpu

N_CLASSES = 10
VMEM_LIMIT = 32 * 1024 * 1024   # hard scoped ceiling; safe on v7x (64 MiB/TC) too


def _round_up(v, m):
    return ((v + m - 1) // m) * m


def _linear_kernel(x_ref, w_ref, b_ref, o_ref):
    # x_ref: (TB, D) bf16 (streamed, double-buffered)
    # w_ref: (D, 10) bf16 (VMEM-resident), b_ref: (1, 10) f32 (VMEM-resident)
    # o_ref: (TB, 10) f32  (masked vst; store slots have slack in this HBM-bound kernel)
    o_ref[...] = (
        jnp.dot(x_ref[...], w_ref[...], preferred_element_type=jnp.float32)
        + b_ref[...]
    )


def prepare_params(weight, bias):
    """One-time hoisted prep.  weight: (10, D), bias: (10,) -> (D, 10) bf16, (1, 10) f32."""
    w_t = jnp.asarray(weight, jnp.float32).T.astype(jnp.bfloat16)    # (D, 10)
    b_row = jnp.asarray(bias, jnp.float32).reshape(1, N_CLASSES)     # (1, 10)
    return w_t, b_row


def _pick_tb(B, D, x_itemsize):
    """Batch-tile size from the VMEM budget and a pipelining/megacore policy."""
    if B <= 8:
        return B
    # --- VMEM cap: 2x(TB,D) x buffers + 2x(TB,10) out buffers + resident params ---
    budget = int(VMEM_LIMIT * 0.8)                       # ~20% headroom
    resident = D * N_CLASSES * 2 + N_CLASSES * 4         # bf16 weight + f32 bias
    per_row = 2 * D * x_itemsize + 2 * N_CLASSES * 4
    tb_vmem = max(8, ((budget - resident) // per_row) // 8 * 8)
    # --- pipelining cap: >= ~4 grid steps for large B, floor 256 rows ---
    tb_pipe = max(256, _round_up(pl.cdiv(B, 4), 8))
    tb = min(tb_vmem, tb_pipe)
    tb = min(tb, max(8, (B // 8) * 8))                   # don't exceed the batch
    # --- v7x megacore: prefer an even grid-step count when there are >1 steps ---
    steps = pl.cdiv(B, tb)
    if steps > 1 and steps % 2 == 1:
        tb = min(tb, max(8, _round_up(pl.cdiv(B, steps + 1), 8)))
    return tb


def logistic_regression_forward(x, w_t, b_row, *, tb_override=None):
    """x: (B, ...) -> logits (B, 10) f32.  w_t: (D, 10) bf16, b_row: (1, 10) f32."""
    B = x.shape[0]
    x2d = x.reshape(B, -1)                               # same as torch .view(B, -1)
    D = x2d.shape[1]
    assert w_t.shape == (D, N_CLASSES) and b_row.shape == (1, N_CLASSES)

    if x2d.dtype != jnp.bfloat16:
        x2d = x2d.astype(jnp.bfloat16)                   # halves the dominant x read

    TB = tb_override if tb_override is not None else _pick_tb(B, D, x2d.dtype.itemsize)
    if TB >= B:
        TB = B                                           # single block: dims == full array dims
    else:
        TB = max(8, (TB // 8) * 8)                       # (8,128) sublane rule for partial blocks

    grid_steps = pl.cdiv(B, TB)                          # ragged last block, no jnp.pad of x
    flops = 2 * B * D * N_CLASSES
    bytes_accessed = (B * D * x2d.dtype.itemsize + D * N_CLASSES * 2
                      + N_CLASSES * 4 + B * N_CLASSES * 4)

    return pl.pallas_call(
        _linear_kernel,
        out_shape=jax.ShapeDtypeStruct((B, N_CLASSES), jnp.float32),
        grid_spec=pltpu.PrefetchScalarGridSpec(
            num_scalar_prefetch=0,
            grid=(grid_steps,),
            in_specs=[
                pl.BlockSpec((TB, D), lambda i: (i, 0)),          # streamed x
                pl.BlockSpec((D, N_CLASSES), lambda i: (0, 0)),   # weight: VMEM-resident
                pl.BlockSpec((1, N_CLASSES), lambda i: (0, 0)),   # bias: VMEM-resident
            ],
            out_specs=pl.BlockSpec((TB, N_CLASSES), lambda i: (i, 0)),
        ),
        compiler_params=pltpu.CompilerParams(
            dimension_semantics=("parallel",),                    # megacore sharding on v7x
            vmem_limit_bytes=VMEM_LIMIT,
        ),
        cost_estimate=pl.CostEstimate(
            flops=flops, transcendentals=0, bytes_accessed=bytes_accessed
        ),
    )(x2d, w_t, b_row)


if __name__ == "__main__":
    key = jax.random.PRNGKey(0)
    k_x, k_w, k_b, k_x2 = jax.random.split(key, 4)

    # MNIST-like small shapes consistent with the module: dimensions = 1*28*28 = 784
    B, C, H, W = 8, 1, 28, 28
    D = C * H * W

    x = jax.random.normal(k_x, (B, C, H, W), dtype=jnp.float32)

    # nn.Linear(D, 10) parameter shapes: weight (10, D), bias (10,)
    bound = 1.0 / float(jnp.sqrt(D))
    weight = jax.random.uniform(k_w, (N_CLASSES, D), jnp.float32, -bound, bound)
    bias = jax.random.uniform(k_b, (N_CLASSES,), jnp.float32, -bound, bound)

    w_t, b_row = prepare_params(weight, bias)            # one-time, hoisted

    # Single-block path
    out = jax.block_until_ready(logistic_regression_forward(x, w_t, b_row))
    ref = x.reshape(B, -1) @ weight.T + bias
    assert out.shape == (B, N_CLASSES)
    assert jnp.allclose(out, ref, atol=3e-2, rtol=3e-2), float(jnp.max(jnp.abs(out - ref)))

    # Multi-step grid + ragged last block (B not a multiple of TB), no padding pass
    B2 = 20
    x2 = jax.random.normal(k_x2, (B2, C, H, W), dtype=jnp.float32)
    out2 = jax.block_until_ready(
        logistic_regression_forward(x2, w_t, b_row, tb_override=8)
    )
    ref2 = x2.reshape(B2, -1) @ weight.T + bias
    assert out2.shape == (B2, N_CLASSES)
    assert jnp.allclose(out2, ref2, atol=3e-2, rtol=3e-2), float(jnp.max(jnp.abs(out2 - ref2)))

    print("KERNEL_OK")
</pallas_src>

<mosaic_0001>
module attributes {stable_mosaic.version = 11 : i64} {
  func.func @_linear_kernel(%arg0: i32, %arg1: memref<8x784xbf16, #tpu.memory_space<vmem>>, %arg2: memref<784x10xbf16, #tpu.memory_space<vmem>>, %arg3: memref<1x10xf32, #tpu.memory_space<vmem>>, %arg4: memref<8x10xf32, #tpu.memory_space<vmem>>) attributes {dimension_semantics = [#tpu.dimension_semantics<parallel>], iteration_bounds = array<i64: 1>, scalar_prefetch = 0 : i64, scratch_operands = 0 : i64, tpu.core_type = #tpu.core_type<tc>, window_params = [{transform_indices = @transform_0, window_bounds = array<i64: 8, 784>}, {pipeline_mode = #tpu.pipeline_mode<synchronous>, transform_indices = @transform_1, window_bounds = array<i64: 784, 10>}, {pipeline_mode = #tpu.pipeline_mode<synchronous>, transform_indices = @transform_2, window_bounds = array<i64: 1, 10>}, {transform_indices = @transform_3, window_bounds = array<i64: 8, 10>}]} {
    %c0 = arith.constant 0 : index
    %c0_0 = arith.constant 0 : index
    %0 = vector.load %arg1[%c0, %c0_0] : memref<8x784xbf16, #tpu.memory_space<vmem>>, vector<8x784xbf16>
    %c0_1 = arith.constant 0 : index
    %c0_2 = arith.constant 0 : index
    %1 = vector.load %arg2[%c0_1, %c0_2] : memref<784x10xbf16, #tpu.memory_space<vmem>>, vector<784x10xbf16>
    %cst = arith.constant dense<0.000000e+00> : vector<8x10xf32>
    %2 = tpu.matmul %0, %1, %cst {dimension_numbers = #tpu.dot_dimension_numbers<[1], [0], [0], [1], [0, 0, 1, 1], [], []>} : vector<8x784xbf16>, vector<784x10xbf16>, vector<8x10xf32> -> vector<8x10xf32>
    %c0_3 = arith.constant 0 : index
    %c0_4 = arith.constant 0 : index
    %3 = vector.load %arg3[%c0_3, %c0_4] : memref<1x10xf32, #tpu.memory_space<vmem>>, vector<1x10xf32>
    %4 = vector.broadcast %3 : vector<1x10xf32> to vector<8x10xf32>
    %5 = arith.addf %2, %4 : vector<8x10xf32>
    %c0_5 = arith.constant 0 : index
    %c0_6 = arith.constant 0 : index
    %6 = vector.load %arg4[%c0_5, %c0_6] : memref<8x10xf32, #tpu.memory_space<vmem>>, vector<8x10xf32>
    tpu.vector_store %arg4[%c0_5, %c0_6], %5 {strides = array<i32>} : memref<8x10xf32, #tpu.memory_space<vmem>>, vector<8x10xf32>,
    return
  }
  func.func @transform_0(%arg0: i32) -> (i32, i32) {
    %c0_i32 = arith.constant 0 : i32
    %c0_i32_0 = arith.constant 0 : i32
    return %arg0, %c0_i32 : i32, i32
  }
  func.func @transform_1(%arg0: i32) -> (i32, i32) {
    %c0_i32 = arith.constant 0 : i32
    %c0_i32_0 = arith.constant 0 : i32
    %c0_i32_1 = arith.constant 0 : i32
    return %c0_i32, %c0_i32_0 : i32, i32
  }
  func.func @transform_2(%arg0: i32) -> (i32, i32) {
    %c0_i32 = arith.constant 0 : i32
    %c0_i32_0 = arith.constant 0 : i32
    %c0_i32_1 = arith.constant 0 : i32
    return %c0_i32, %c0_i32_0 : i32, i32
  }
  func.func @transform_3(%arg0: i32) -> (i32, i32) {
    %c0_i32 = arith.constant 0 : i32
    %c0_i32_0 = arith.constant 0 : i32
    return %arg0, %c0_i32 : i32, i32
  }
}

</mosaic_0001>

<llo_original>
// kernel: tpu_custom_call.1
$region0: #{tpu_custom_call.1}
  #allocation0 [shape = 'u32[]', space=smem, size = 0x4, offset = 0x4, fixed_abs, tag = 'smem constant byte address 0x4 - core index']
  #allocation1 [shape = 'u32[144,128]{1,0:T(1,128)}', space=vmem, size = 0x12000, scoped, tag = 'internal scratch']
  %s0 = inlined_call_operand.vmem [shape: bf16[8,784], index: 0, kind: input, shape index: {}]
  %s1 = inlined_call_operand.vmem [shape: bf16[784,10], index: 1, kind: input, shape index: {}]
  %s2 = inlined_call_operand.vmem [shape: f32[1,10], index: 2, kind: input, shape index: {}]
  %s3 = inlined_call_operand.hbm [shape: f32[8,10], index: 3, kind: output, shape index: {}]
  %s4 = sld [smem:[#allocation0]]
  $region22: #{tpu_custom_call.1} parent=0
    _
  %s6 = ssub.s32 1, %s4
  %s7 = scalar_select 0, %s6, %s4
  $region1: #{tpu_custom_call.1} parent=0
    #allocation2 [shape = 'u8[4096]{0}', space=vmem, size = 0x1000, scoped, tag = 'output window, operand 0, single buffered']
    #allocation3 [shape = 's32[1]{0}', space=sflag, size = 0x4, scoped, tag = 'scoped memory for tpu_custom_call.1']
    %8 = vsyncpa [#allocation3], 0
    // Predicated region
    $region2: #{tpu_custom_call.1} parent=1 // pred_check
      _
    $region3: #{tpu_custom_call.1} parent=1 // pred_check_branch
      %10 = sbr.rel (0) target = $region5
    $region4: #{tpu_custom_call.1} parent=1 // pred_region
      _
    $region5: #{tpu_custom_call.1} parent=1 // pred_fallthru
      _
    // Predicated region
    $region6: #{tpu_custom_call.1} parent=1 // pred_check
      _
    $region7: #{tpu_custom_call.1} parent=1 // pred_check_branch
      %12 = sbr.rel (0) target = $region9
    $region8: #{tpu_custom_call.1} parent=1 // pred_region
      _
    $region9: #{tpu_custom_call.1} parent=1 // pred_fallthru
      _
    // Predicated region
    $region10: #{tpu_custom_call.1} parent=1 // pred_check
      _
    $region11: #{tpu_custom_call.1} parent=1 // pred_check_branch
      %14 = sbr.rel (0) target = $region13
    $region12: #{tpu_custom_call.1} parent=1 // pred_region
      _
    $region13: #{tpu_custom_call.1} parent=1 // pred_fallthru
      _
    %v16 = vld [vmem:[%s0] sm:$0xff]
    %v17 = vld [vmem:[%s0 + $0x8] sm:$0xff]
    %v18 = vld [vmem:[%s0 + $0x10] sm:$0xff]
    %v19 = vld [vmem:[%s0 + $0x18] sm:$0xf]
    %v20 = vld [vmem:[%s1] sm:$0xf]
    %v21 = vld [vmem:[%s1 + $0x4] sm:$0xf]
    %v22 = vld [vmem:[%s1 + $0x8] sm:$0xf]
    %v23 = vld [vmem:[%s1 + $0xc] sm:$0xf]
    %v24 = vld [vmem:[%s1 + $0x10] sm:$0xf]
    %v25 = vld [vmem:[%s1 + $0x14] sm:$0xf]
    %v26 = vld [vmem:[%s1 + $0x18] sm:$0xf]
    %v27 = vld [vmem:[%s1 + $0x1c] sm:$0xf]
    %v28 = vld [vmem:[%s1 + $0x20] sm:$0xf]
    %v29 = vld [vmem:[%s1 + $0x24] sm:$0xf]
    %v30 = vld [vmem:[%s1 + $0x28] sm:$0xf]
    %v31 = vld [vmem:[%s1 + $0x2c] sm:$0xf]
    %v32 = vld [vmem:[%s1 + $0x30] sm:$0xf]
    %v33 = vld [vmem:[%s1 + $0x34] sm:$0xf]
    %v34 = vld [vmem:[%s1 + $0x38] sm:$0xf]
    %v35 = vld [vmem:[%s1 + $0x3c] sm:$0xf]
    %v36 = vld [vmem:[%s1 + $0x40] sm:$0xf]
    %v37 = vld [vmem:[%s1 + $0x44] sm:$0xf]
    %v38 = vld [vmem:[%s1 + $0x48] sm:$0xf]
    %v39 = vld [vmem:[%s1 + $0x4c] sm:$0xf]
    %v40 = vld [vmem:[%s1 + $0x50] sm:$0xf]
    %v41 = vld [vmem:[%s1 + $0x54] sm:$0xf]
    %v42 = vld [vmem:[%s1 + $0x58] sm:$0xf]
    %v43 = vld [vmem:[%s1 + $0x5c] sm:$0xf]
    %v44 = vld [vmem:[%s1 + $0x60] sm:$0xf]
    %v45 = vld [vmem:[%s1 + $0x64] sm:$0xf]
    %v46 = vld [vmem:[%s1 + $0x68] sm:$0xf]
    %v47 = vld [vmem:[%s1 + $0x6c] sm:$0xf]
    %v48 = vld [vmem:[%s1 + $0x70] sm:$0xf]
    %v49 = vld [vmem:[%s1 + $0x74] sm:$0xf]
    %v50 = vld [vmem:[%s1 + $0x78] sm:$0xf]
    %v51 = vld [vmem:[%s1 + $0x7c] sm:$0xf]
    %v52 = vld [vmem:[%s1 + $0x80] sm:$0xf]
    %v53 = vld [vmem:[%s1 + $0x84] sm:$0xf]
    %v54 = vld [vmem:[%s1 + $0x88] sm:$0xf]
    %v55 = vld [vmem:[%s1 + $0x8c] sm:$0xf]
    %v56 = vld [vmem:[%s1 + $0x90] sm:$0xf]
    %v57 = vld [vmem:[%s1 + $0x94] sm:$0xf]
    %v58 = vld [vmem:[%s1 + $0x98] sm:$0xf]
    %v59 = vld [vmem:[%s1 + $0x9c] sm:$0xf]
    %v60 = vld [vmem:[%s1 + $0xa0] sm:$0xf]
    %v61 = vld [vmem:[%s1 + $0xa4] sm:$0xf]
    %v62 = vld [vmem:[%s1 + $0xa8] sm:$0xf]
    %v63 = vld [vmem:[%s1 + $0xac] sm:$0xf]
    %v64 = vld [vmem:[%s1 + $0xb0] sm:$0xf]
    %v65 = vld [vmem:[%s1 + $0xb4] sm:$0xf]
    %v66 = vld [vmem:[%s1 + $0xb8] sm:$0xf]
    %v67 = vld [vmem:[%s1 + $0xbc] sm:$0xf]
    %v68 = vld [vmem:[%s1 + $0xc0] sm:$0xf]
    %v69 = vld [vmem:[%s1 + $0xc4] sm:$0xf]
    %v70 = vld [vmem:[%s1 + $0xc8] sm:$0xf]
    %v71 = vld [vmem:[%s1 + $0xcc] sm:$0xf]
    %v72 = vld [vmem:[%s1 + $0xd0] sm:$0xf]
    %v73 = vld [vmem:[%s1 + $0xd4] sm:$0xf]
    %v74 = vld [vmem:[%s1 + $0xd8] sm:$0xf]
    %v75 = vld [vmem:[%s1 + $0xdc] sm:$0xf]
    %v76 = vld [vmem:[%s1 + $0xe0] sm:$0xf]
    %v77 = vld [vmem:[%s1 + $0xe4] sm:$0xf]
    %v78 = vld [vmem:[%s1 + $0xe8] sm:$0xf]
    %v79 = vld [vmem:[%s1 + $0xec] sm:$0xf]
    %v80 = vld [vmem:[%s1 + $0xf0] sm:$0xf]
    %v81 = vld [vmem:[%s1 + $0xf4] sm:$0xf]
    %v82 = vld [vmem:[%s1 + $0xf8] sm:$0xf]
    %v83 = vld [vmem:[%s1 + $0xfc] sm:$0xf]
    %v84 = vld [vmem:[%s1 + $0x100] sm:$0xf]
    %v85 = vld [vmem:[%s1 + $0x104] sm:$0xf]
    %v86 = vld [vmem:[%s1 + $0x108] sm:$0xf]
    %v87 = vld [vmem:[%s1 + $0x10c] sm:$0xf]
    %v88 = vld [vmem:[%s1 + $0x110] sm:$0xf]
    %v89 = vld [vmem:[%s1 + $0x114] sm:$0xf]
    %v90 = vld [vmem:[%s1 + $0x118] sm:$0xf]
    %v91 = vld [vmem:[%s1 + $0x11c] sm:$0xf]
    %v92 = vld [vmem:[%s1 + $0x120] sm:$0xf]
    %v93 = vld [vmem:[%s1 + $0x124] sm:$0xf]
    %v94 = vld [vmem:[%s1 + $0x128] sm:$0xf]
    %v95 = vld [vmem:[%s1 + $0x12c] sm:$0xf]
    %v96 = vld [vmem:[%s1 + $0x130] sm:$0xf]
    %v97 = vld [vmem:[%s1 + $0x134] sm:$0xf]
    %v98 = vld [vmem:[%s1 + $0x138] sm:$0xf]
    %v99 = vld [vmem:[%s1 + $0x13c] sm:$0xf]
    %v100 = vld [vmem:[%s1 + $0x140] sm:$0xf]
    %v101 = vld [vmem:[%s1 + $0x144] sm:$0xf]
    %v102 = vld [vmem:[%s1 + $0x148] sm:$0xf]
    %v103 = vld [vmem:[%s1 + $0x14c] sm:$0xf]
    %v104 = vld [vmem:[%s1 + $0x150] sm:$0xf]
    %v105 = vld [vmem:[%s1 + $0x154] sm:$0xf]
    %v106 = vld [vmem:[%s1 + $0x158] sm:$0xf]
    %v107 = vld [vmem:[%s1 + $0x15c] sm:$0xf]
    %v108 = vld [vmem:[%s1 + $0x160] sm:$0xf]
    %v109 = vld [vmem:[%s1 + $0x164] sm:$0xf]
    %v110 = vld [vmem:[%s1 + $0x168] sm:$0xf]
    %v111 = vld [vmem:[%s1 + $0x16c] sm:$0xf]
    %v112 = vld [vmem:[%s1 + $0x170] sm:$0xf]
    %v113 = vld [vmem:[%s1 + $0x174] sm:$0xf]
    %v114 = vld [vmem:[%s1 + $0x178] sm:$0xf]
    %v115 = vld [vmem:[%s1 + $0x17c] sm:$0xf]
    %v116 = vld [vmem:[%s1 + $0x180] sm:$0xf]
    %v117 = vld [vmem:[%s1 + $0x184] sm:$0xf]
    %v118 = vld [vmem:[%s2] sm:$0x1]
    %v120 = vlaneseq
    %v121 = vshrl.u32 %v120, 7
    %v122 = vsub.s32 0, %v121
    %v123 = vrot.slane %v118, %v122
    %v129 = vunpack.c.l.b16 %v16
    %v130 = vunpack.c.h.b16 %v16
    %v131 = vunpack.c.l.b16 %v17
    %v132 = vunpack.c.h.b16 %v17
    %v133 = vunpack.c.l.b16 %v18
    %v134 = vunpack.c.h.b16 %v18
    %v135 = vunpack.c.l.b16 %v19
    %v136 = vpack.c.b16 %v129, %v129
    %v137 = vpack.c.b16 %v130, %v130
    %v138 = vpack.c.b16 %v131, %v131
    %v139 = vpack.c.b16 %v132, %v132
    %v140 = vpack.c.b16 %v133, %v133
    %v141 = vpack.c.b16 %v134, %v134
    %v142 = vpack.c.b16 %v135, %v135
    %v247 = vunpack.c.l.b16 %v20
    %v248 = vunpack.c.l.b16 %v21
    %v249 = vunpack.c.l.b16 %v22
    %v250 = vunpack.c.l.b16 %v23
    %v251 = vunpack.c.l.b16 %v24
    %v252 = vunpack.c.l.b16 %v25
    %v253 = vunpack.c.l.b16 %v26
    %v254 = vunpack.c.l.b16 %v27
    %v255 = vunpack.c.l.b16 %v28
    %v256 = vunpack.c.l.b16 %v29
    %v257 = vunpack.c.l.b16 %v30
    %v258 = vunpack.c.l.b16 %v31
    %v259 = vunpack.c.l.b16 %v32
    %v260 = vunpack.c.l.b16 %v33
    %v261 = vunpack.c.l.b16 %v34
    %v262 = vunpack.c.l.b16 %v35
    %v263 = vunpack.c.l.b16 %v36
    %v264 = vunpack.c.l.b16 %v37
    %v265 = vunpack.c.l.b16 %v38
    %v266 = vunpack.c.l.b16 %v39
    %v267 = vunpack.c.l.b16 %v40
    %v268 = vunpack.c.l.b16 %v41
    %v269 = vunpack.c.l.b16 %v42
    %v270 = vunpack.c.l.b16 %v43
    %v271 = vunpack.c.l.b16 %v44
    %v272 = vunpack.c.l.b16 %v45
    %v273 = vunpack.c.l.b16 %v46
    %v274 = vunpack.c.l.b16 %v47
    %v275 = vunpack.c.l.b16 %v48
    %v276 = vunpack.c.l.b16 %v49
    %v277 = vunpack.c.l.b16 %v50
    %v278 = vunpack.c.l.b16 %v51
    %v279 = vunpack.c.l.b16 %v52
    %v280 = vunpack.c.l.b16 %v53
    %v281 = vunpack.c.l.b16 %v54
    %v282 = vunpack.c.l.b16 %v55
    %v283 = vunpack.c.l.b16 %v56
    %v284 = vunpack.c.l.b16 %v57
    %v285 = vunpack.c.l.b16 %v58
    %v286 = vunpack.c.l.b16 %v59
    %v287 = vunpack.c.l.b16 %v60
    %v288 = vunpack.c.l.b16 %v61
    %v289 = vunpack.c.l.b16 %v62
    %v290 = vunpack.c.l.b16 %v63
    %v291 = vunpack.c.l.b16 %v64
    %v292 = vunpack.c.l.b16 %v65
    %v293 = vunpack.c.l.b16 %v66
    %v294 = vunpack.c.l.b16 %v67
    %v295 = vunpack.c.l.b16 %v68
    %v296 = vunpack.c.l.b16 %v69
    %v297 = vunpack.c.l.b16 %v70
    %v298 = vunpack.c.l.b16 %v71
    %v299 = vunpack.c.l.b16 %v72
    %v300 = vunpack.c.l.b16 %v73
    %v301 = vunpack.c.l.b16 %v74
    %v302 = vunpack.c.l.b16 %v75
    %v303 = vunpack.c.l.b16 %v76
    %v304 = vunpack.c.l.b16 %v77
    %v305 = vunpack.c.l.b16 %v78
    %v306 = vunpack.c.l.b16 %v79
    %v307 = vunpack.c.l.b16 %v80
    %v308 = vunpack.c.l.b16 %v81
    %v309 = vunpack.c.l.b16 %v82
    %v310 = vunpack.c.l.b16 %v83
    %v311 = vunpack.c.l.b16 %v84
    %v312 = vunpack.c.l.b16 %v85
    %v313 = vunpack.c.l.b16 %v86
    %v314 = vunpack.c.l.b16 %v87
    %v315 = vunpack.c.l.b16 %v88
    %v316 = vunpack.c.l.b16 %v89
    %v317 = vunpack.c.l.b16 %v90
    %v318 = vunpack.c.l.b16 %v91
    %v319 = vunpack.c.l.b16 %v92
    %v320 = vunpack.c.l.b16 %v93
    %v321 = vunpack.c.l.b16 %v94
    %v322 = vunpack.c.l.b16 %v95
    %v323 = vunpack.c.l.b16 %v96
    %v324 = vunpack.c.l.b16 %v97
    %v325 = vunpack.c.l.b16 %v98
    %v326 = vunpack.c.l.b16 %v99
    %v327 = vunpack.c.l.b16 %v100
    %v328 = vunpack.c.l.b16 %v101
    %v329 = vunpack.c.l.b16 %v102
    %v330 = vunpack.c.l.b16 %v103
    %v331 = vunpack.c.l.b16 %v104
    %v332 = vunpack.c.l.b16 %v105
    %v333 = vunpack.c.l.b16 %v106
    %v334 = vunpack.c.l.b16 %v107
    %v335 = vunpack.c.l.b16 %v108
    %v336 = vunpack.c.l.b16 %v109
    %v337 = vunpack.c.l.b16 %v110
    %v338 = vunpack.c.l.b16 %v111
    %v339 = vunpack.c.l.b16 %v112
    %v340 = vunpack.c.l.b16 %v113
    %v341 = vunpack.c.l.b16 %v114
    %v342 = vunpack.c.l.b16 %v115
    %v343 = vunpack.c.l.b16 %v116
    %v344 = vunpack.c.l.b16 %v117
    %v345 = vpack.c.b16 %v248, %v247
    %v346 = vpack.c.b16 %v250, %v249
    %v347 = vpack.c.b16 %v252, %v251
    %v348 = vpack.c.b16 %v254, %v253
    %v349 = vpack.c.b16 %v256, %v255
    %v350 = vpack.c.b16 %v258, %v257
    %v351 = vpack.c.b16 %v260, %v259
    %v352 = vpack.c.b16 %v262, %v261
    %v353 = vpack.c.b16 %v264, %v263
    %v354 = vpack.c.b16 %v266, %v265
    %v355 = vpack.c.b16 %v268, %v267
    %v356 = vpack.c.b16 %v270, %v269
    %v357 = vpack.c.b16 %v272, %v271
    %v358 = vpack.c.b16 %v274, %v273
    %v359 = vpack.c.b16 %v276, %v275
    %v360 = vpack.c.b16 %v278, %v277
    %v361 = vpack.c.b16 %v280, %v279
    %v362 = vpack.c.b16 %v282, %v281
    %v363 = vpack.c.b16 %v284, %v283
    %v364 = vpack.c.b16 %v286, %v285
    %v365 = vpack.c.b16 %v288, %v287
    %v366 = vpack.c.b16 %v290, %v289
    %v367 = vpack.c.b16 %v292, %v291
    %v368 = vpack.c.b16 %v294, %v293
    %v369 = vpack.c.b16 %v296, %v295
    %v370 = vpack.c.b16 %v298, %v297
    %v371 = vpack.c.b16 %v300, %v299
    %v372 = vpack.c.b16 %v302, %v301
    %v373 = vpack.c.b16 %v304, %v303
    %v374 = vpack.c.b16 %v306, %v305
    %v375 = vpack.c.b16 %v308, %v307
    %v376 = vpack.c.b16 %v310, %v309
    %v377 = vpack.c.b16 %v312, %v311
    %v378 = vpack.c.b16 %v314, %v313
    %v379 = vpack.c.b16 %v316, %v315
    %v380 = vpack.c.b16 %v318, %v317
    %v381 = vpack.c.b16 %v320, %v319
    %v382 = vpack.c.b16 %v322, %v321
    %v383 = vpack.c.b16 %v324, %v323
    %v384 = vpack.c.b16 %v326, %v325
    %v385 = vpack.c.b16 %v328, %v327
    %v386 = vpack.c.b16 %v330, %v329
    %v387 = vpack.c.b16 %v332, %v331
    %v388 = vpack.c.b16 %v334, %v333
    %v389 = vpack.c.b16 %v336, %v335
    %v390 = vpack.c.b16 %v338, %v337
    %v391 = vpack.c.b16 %v340, %v339
    %v392 = vpack.c.b16 %v342, %v341
    %v393 = vpack.c.b16 %v344, %v343
    %vm443 = vcmask 130048
    %v445 = vsel %vm443, %v142, 0
    %447 = vmatprep.subr.bf16.mxu0 0
    %448 = vmatpush1.bf16.msra.mxu0 %v352
    %449 = vmatprep.subr.bf16.mxu0 0
    %450 = vmatpush1.bf16.msra.mxu0 %v351
    %451 = vmatprep.subr.bf16.mxu0 0
    %452 = vmatpush1.bf16.msra.mxu0 %v350
    %453 = vmatprep.subr.bf16.mxu0 0
    %454 = vmatpush1.bf16.msra.mxu0 %v349
    %455 = vmatprep.subr.bf16.mxu0 0
    %456 = vmatpush1.bf16.msra.mxu0 %v348
    %457 = vmatprep.subr.bf16.mxu0 0
    %458 = vmatpush1.bf16.msra.mxu0 %v347
    %459 = vmatprep.subr.bf16.mxu0 0
    %460 = vmatpush1.bf16.msra.mxu0 %v346
    %461 = vmatprep.subr.bf16.mxu0 0
    %462 = vmatpush1.bf16.msra.mxu0 %v345
    %463 = vmatprep.subr.bf16.mxu0 0
    %464 = vmatpush2.bf16.msra.mxu0 %v360
    %465 = vmatprep.subr.bf16.mxu0 0
    %466 = vmatpush2.bf16.msra.mxu0 %v359
    %467 = vmatprep.subr.bf16.mxu0 0
    %468 = vmatpush2.bf16.msra.mxu0 %v358
    %469 = vmatprep.subr.bf16.mxu0 0
    %470 = vmatpush2.bf16.msra.mxu0 %v357
    %471 = vmatprep.subr.bf16.mxu0 0
    %472 = vmatpush2.bf16.msra.mxu0 %v356
    %473 = vmatprep.subr.bf16.mxu0 0
    %474 = vmatpush2.bf16.msra.mxu0 %v355
    %475 = vmatprep.subr.bf16.mxu0 0
    %476 = vmatpush2.bf16.msra.mxu0 %v354
    %477 = vmatprep.subr.bf16.mxu0 0
    %478 = vmatpush2.bf16.msra.mxu0 %v353
    %479 = vmatprep.mubr.bf16.mxu0 %v137
    %480 = vmatmul.mubr.bf16.gmra.mxu0 %v136
    %v481 = vpop.f32.mrf.mxu0
    %v482 = vadd.f32 %v123, %v481
    %v483 = vpop.f32.mrf.mxu0
    %v484 = vpop.f32.mrf.mxu0
    %v485 = vpop.f32.mrf.mxu0
    %486 = vdwg.mxu0
    %487 = vmatprep.subr.bf16.mxu0 0
    %488 = vmatpush1.bf16.msra.mxu0 %v368
    %489 = vmatprep.subr.bf16.mxu0 0
    %490 = vmatpush1.bf16.msra.mxu0 %v367
    %491 = vmatprep.subr.bf16.mxu0 0
    %492 = vmatpush1.bf16.msra.mxu0 %v366
    %493 = vmatprep.subr.bf16.mxu0 0
    %494 = vmatpush1.bf16.msra.mxu0 %v365
    %495 = vmatprep.subr.bf16.mxu0 0
    %496 = vmatpush1.bf16.msra.mxu0 %v364
    %497 = vmatprep.subr.bf16.mxu0 0
    %498 = vmatpush1.bf16.msra.mxu0 %v363
    %499 = vmatprep.subr.bf16.mxu0 0
    %500 = vmatpush1.bf16.msra.mxu0 %v362
    %501 = vmatprep.subr.bf16.mxu0 0
    %502 = vmatpush1.bf16.msra.mxu0 %v361
    %503 = vmatprep.subr.bf16.mxu0 0
    %504 = vmatpush2.bf16.msra.mxu0 %v376
    %505 = vmatprep.subr.bf16.mxu0 0
    %506 = vmatpush2.bf16.msra.mxu0 %v375
    %507 = vmatprep.subr.bf16.mxu0 0
    %508 = vmatpush2.bf16.msra.mxu0 %v374
    %509 = vmatprep.subr.bf16.mxu0 0
    %510 = vmatpush2.bf16.msra.mxu0 %v373
    %511 = vmatprep.subr.bf16.mxu0 0
    %512 = vmatpush2.bf16.msra.mxu0 %v372
    %513 = vmatprep.subr.bf16.mxu0 0
    %514 = vmatpush2.bf16.msra.mxu0 %v371
    %515 = vmatprep.subr.bf16.mxu0 0
    %516 = vmatpush2.bf16.msra.mxu0 %v370
    %517 = vmatprep.subr.bf16.mxu0 0
    %518 = vmatpush2.bf16.msra.mxu0 %v369
    %519 = vmatprep.mubr.bf16.mxu0 %v139
    %520 = vmatmul.mubr.bf16.gmra.mxu0 %v138
    %v521 = vpop.f32.mrf.mxu0
    %v522 = vadd.f32 %v482, %v521
    %v523 = vpop.f32.mrf.mxu0
    %v524 = vpop.f32.mrf.mxu0
    %v525 = vpop.f32.mrf.mxu0
    %526 = vdwg.mxu0
    %527 = vmatprep.subr.bf16.mxu0 0
    %528 = vmatpush1.bf16.msra.mxu0 %v384
    %529 = vmatprep.subr.bf16.mxu0 0
    %530 = vmatpush1.bf16.msra.mxu0 %v383
    %531 = vmatprep.subr.bf16.mxu0 0
    %532 = vmatpush1.bf16.msra.mxu0 %v382
    %533 = vmatprep.subr.bf16.mxu0 0
    %534 = vmatpush1.bf16.msra.mxu0 %v381
    %535 = vmatprep.subr.bf16.mxu0 0
    %536 = vmatpush1.bf16.msra.mxu0 %v380
    %537 = vmatprep.subr.bf16.mxu0 0
    %538 = vmatpush1.bf16.msra.mxu0 %v379
    %539 = vmatprep.subr.bf16.mxu0 0
    %540 = vmatpush1.bf16.msra.mxu0 %v378
    %541 = vmatprep.subr.bf16.mxu0 0
    %542 = vmatpush1.bf16.msra.mxu0 %v377
    %543 = vmatprep.subr.bf16.mxu0 0
    %544 = vmatpush2.bf16.msra.mxu0 %v392
    %545 = vmatprep.subr.bf16.mxu0 0
    %546 = vmatpush2.bf16.msra.mxu0 %v391
    %547 = vmatprep.subr.bf16.mxu0 0
    %548 = vmatpush2.bf16.msra.mxu0 %v390
    %549 = vmatprep.subr.bf16.mxu0 0
    %550 = vmatpush2.bf16.msra.mxu0 %v389
    %551 = vmatprep.subr.bf16.mxu0 0
    %552 = vmatpush2.bf16.msra.mxu0 %v388
    %553 = vmatprep.subr.bf16.mxu0 0
    %554 = vmatpush2.bf16.msra.mxu0 %v387
    %555 = vmatprep.subr.bf16.mxu0 0
    %556 = vmatpush2.bf16.msra.mxu0 %v386
    %557 = vmatprep.subr.bf16.mxu0 0
    %558 = vmatpush2.bf16.msra.mxu0 %v385
    %559 = vmatprep.mubr.bf16.mxu0 %v141
    %560 = vmatmul.mubr.bf16.gmra.mxu0 %v140
    %v561 = vpop.f32.mrf.mxu0
    %v562 = vadd.f32 %v522, %v561
    %v563 = vpop.f32.mrf.mxu0
    %v564 = vpop.f32.mrf.mxu0
    %v565 = vpop.f32.mrf.mxu0
    %566 = vdwg.mxu0
    %567 = vmatprep.subr.bf16.mxu0 0
    %568 = vmatpush1.bf16.msra.mxu0 0
    %569 = vmatprep.subr.bf16.mxu0 0
    %570 = vmatpush1.bf16.msra.mxu0 0
    %571 = vmatprep.subr.bf16.mxu0 0
    %572 = vmatpush1.bf16.msra.mxu0 0
    %573 = vmatprep.subr.bf16.mxu0 0
    %574 = vmatpush1.bf16.msra.mxu0 0
    %575 = vmatprep.subr.bf16.mxu0 0
    %576 = vmatpush1.bf16.msra.mxu0 0
    %577 = vmatprep.subr.bf16.mxu0 0
    %578 = vmatpush1.bf16.msra.mxu0 0
    %579 = vmatprep.subr.bf16.mxu0 0
    %580 = vmatpush1.bf16.msra.mxu0 0
    %581 = vmatprep.subr.bf16.mxu0 0
    %582 = vmatpush1.bf16.msra.mxu0 %v393
    %583 = vmatprep.subr.bf16.mxu0 0
    %584 = vmatpush2.bf16.msra.mxu0 0
    %585 = vmatprep.subr.bf16.mxu0 0
    %586 = vmatpush2.bf16.msra.mxu0 0
    %587 = vmatprep.subr.bf16.mxu0 0
    %588 = vmatpush2.bf16.msra.mxu0 0
    %589 = vmatprep.subr.bf16.mxu0 0
    %590 = vmatpush2.bf16.msra.mxu0 0
    %591 = vmatprep.subr.bf16.mxu0 0
    %592 = vmatpush2.bf16.msra.mxu0 0
    %593 = vmatprep.subr.bf16.mxu0 0
    %594 = vmatpush2.bf16.msra.mxu0 0
    %595 = vmatprep.subr.bf16.mxu0 0
    %596 = vmatpush2.bf16.msra.mxu0 0
    %597 = vmatprep.subr.bf16.mxu0 0
    %598 = vmatpush2.bf16.msra.mxu0 0
    %599 = vmatprep.mubr.bf16.mxu0 0
    %600 = vmatmul.mubr.bf16.gmra.mxu0 %v445
    %v601 = vpop.f32.mrf.mxu0
    %v602 = vadd.f32 %v562, %v601
    %v603 = vpop.f32.mrf.mxu0
    %v604 = vpop.f32.mrf.mxu0
    %v605 = vpop.f32.mrf.mxu0
    %606 = vdwg.mxu0
    %vm607 = vcmask 80896
    %608 = vst.msk [vmem:[#allocation2] sm:$0xff] %vm607, %v602
    // Predicated region
    $region14: #{tpu_custom_call.1} parent=1 // pred_check
      _
    $region15: #{tpu_custom_call.1} parent=1 // pred_check_branch
      %610 = sbr.rel (0) target = $region17
    $region16: #{tpu_custom_call.1} parent=1 // pred_region
      %s612 = ssub.s32 128, 128
      %613 = vsyncadd [#allocation3], %s612
      %s615 = sshll.u32 [#allocation2], 4
      %s616 = int_to_ptr.vmem [resolvable:$true] %s615
      %618 = dma.vmem_to_hbm [thread:$0]  %s616, 128, %s3, [#allocation3]
    $region17: #{tpu_custom_call.1} parent=1 // pred_fallthru
      _
    // Predicated region
    $region18: #{tpu_custom_call.1} parent=1 // pred_check
      _
    $region19: #{tpu_custom_call.1} parent=1 // pred_check_branch
      %620 = sbr.rel (0) target = $region21
    $region20: #{tpu_custom_call.1} parent=1 // pred_region
      %621 = dma.done [#allocation3], 128
    $region21: #{tpu_custom_call.1} parent=1 // pred_fallthru
      _
    %622 = vsyncpa [#allocation3], 1

</llo_original>
